<compile_context>
chip_gen: v7x
topology: tpu7x:2x2x1
jax: 0.10.0
libtpu: 0.0.40
codegen_flags: <defaults>
</compile_context>

<pallas_src>
import functools

import jax
import jax.numpy as jnp
from jax import lax
from jax.experimental import pallas as pl
from jax.experimental.pallas import tpu as pltpu

N_HIDDEN = 25          # forced by nn.Linear(25, 1) in the reference module
N_LAYERS = 1
_TILE_BYTES = 8 * 128 * 4   # one padded (8, 128) f32 tile


def _rnn_kernel(x_ref, wih_ref, whh_ref, bias_ref, wlin_ref, blin_ref, h0_ref,
                y_ref, hT_ref, h_state_ref, hall_ref, *, unroll):
    # x_ref      : (TC, B, 1)  time-major input chunk
    # wih_ref    : (1, H)      W_ih reshaped (input size is 1)
    # whh_ref    : (H, H)      W_hh pre-transposed, so h @ whh == h @ W_hh.T
    # bias_ref   : (1, H)      b_ih + b_hh (fused in the wrapper)
    # wlin_ref   : (1, H)      output Linear weight
    # blin_ref   : (1, 1)      output Linear bias
    # h0_ref     : (B, H)      initial hidden state (HBM-aliased with hT)
    # y_ref      : (TC, B)     per-chunk output (time on sublanes; wrapper transposes)
    # hT_ref     : (B, H)      final hidden state
    # h_state_ref: (B, H)      VMEM scratch, hidden state carried across chunks
    # hall_ref   : (TC, B, H)  VMEM scratch, h[t] of this chunk (write-only in loop)
    TC = x_ref.shape[0]

    @pl.when(pl.program_id(0) == 0)
    def _():
        h_state_ref[...] = h0_ref[...].astype(jnp.float32)

    wih = wih_ref[...]      # (1, H)
    bias = bias_ref[...]    # (1, H)
    whh_t = whh_ref[...]    # (H, H) loop-invariant MXU RHS

    def step(t, h):
        # pre[t] computed per step on the VPU; the only serial dependency is h
        # through dot -> tanh, so the x[t+1..] loads issue under that latency.
        pre = (x_ref[t] * wih + bias
               + jnp.dot(h, whh_t, preferred_element_type=jnp.float32))
        h_new = jnp.tanh(pre)
        hall_ref[t] = h_new          # never read inside the loop -> no false alias
        return h_new

    h_final = lax.fori_loop(0, TC, step, h_state_ref[...], unroll=unroll)
    h_state_ref[...] = h_final
    hT_ref[...] = h_final.astype(hT_ref.dtype)

    # Hoisted output projection for the whole chunk: tanh(h_t @ W_lin^T + b_lin).
    h_all = hall_ref[...]                                          # (TC, B, H)
    y_pre = jnp.sum(h_all * wlin_ref[...], axis=-1) + blin_ref[...]  # (TC, B)
    y_ref[...] = jnp.tanh(y_pre).astype(y_ref.dtype)


def _pick_chunk(T, max_chunk=256):
    """Largest chunk <= max_chunk that divides T and is a multiple of 8."""
    if T <= max_chunk:
        return T
    start = max_chunk - (max_chunk % 8)
    for c in range(start, 7, -8):
        if T % c == 0:
            return c
    return T   # no friendly divisor: fall back to a single chunk


def _vmem_limit(TC):
    # Padded residency: x chunk (double-buffered) + hall scratch + y chunk
    # (double-buffered) + weights / hidden-state blocks, plus headroom.
    need = (2 * TC + TC + 2 * pl.cdiv(TC, 8) + 16) * _TILE_BYTES
    return int(min(max(2 * need, 16 * 1024 * 1024), 64 * 1024 * 1024))


def model_forward(x, params, h=None):
    """x: (B, T, 1) float32, batch-first (like the PyTorch module). Returns (y, h)."""
    B, T, _ = x.shape
    H = N_HIDDEN
    h0 = jnp.zeros((B, H), jnp.float32) if h is None else h[0].astype(jnp.float32)

    x_tm = jnp.transpose(x, (1, 0, 2)).astype(jnp.float32)        # (T, B, 1) time-major

    # Wrapper-side weight plumbing: pre-transpose / reshape / fuse biases once.
    w_ih_row = params["w_ih"].reshape(1, H).astype(jnp.float32)   # (H,1) -> (1,H)
    w_hh_t = params["w_hh"].T.astype(jnp.float32)                 # (H,H) transposed
    bias = (params["b_ih"] + params["b_hh"]).astype(jnp.float32)  # (1,H) fused
    w_lin = params["w_lin"].astype(jnp.float32)                   # (1,H)
    b_lin = params["b_lin"].astype(jnp.float32)                   # (1,1)

    TC = _pick_chunk(T)
    n_chunks = T // TC
    unroll = True if TC <= 16 else 8

    grid_spec = pltpu.PrefetchScalarGridSpec(
        num_scalar_prefetch=0,
        grid=(n_chunks,),
        in_specs=[
            pl.BlockSpec((TC, B, 1), lambda c: (c, 0, 0)),   # x chunk
            pl.BlockSpec((1, H), lambda c: (0, 0)),          # W_ih row
            pl.BlockSpec((H, H), lambda c: (0, 0)),          # W_hh^T
            pl.BlockSpec((1, H), lambda c: (0, 0)),          # fused bias
            pl.BlockSpec((1, H), lambda c: (0, 0)),          # W_lin
            pl.BlockSpec((1, 1), lambda c: (0, 0)),          # b_lin
            pl.BlockSpec((B, H), lambda c: (0, 0)),          # h0
        ],
        out_specs=(
            pl.BlockSpec((TC, B), lambda c: (c, 0)),         # y chunk
            pl.BlockSpec((B, H), lambda c: (0, 0)),          # hT (resident)
        ),
        scratch_shapes=[
            pltpu.VMEM((B, H), jnp.float32),       # hidden state carried across chunks
            pltpu.VMEM((TC, B, H), jnp.float32),   # per-chunk h[t] for output projection
        ],
    )

    y_tb, hT = pl.pallas_call(
        functools.partial(_rnn_kernel, unroll=unroll),
        out_shape=(jax.ShapeDtypeStruct((T, B), jnp.float32),
                   jax.ShapeDtypeStruct((B, H), jnp.float32)),
        grid_spec=grid_spec,
        input_output_aliases={6: 1},               # h0 buffer reused for hT
        compiler_params=pltpu.CompilerParams(
            dimension_semantics=("arbitrary",),    # recurrence: chunks are sequential
            vmem_limit_bytes=_vmem_limit(TC)),
    )(x_tm, w_ih_row, w_hh_t, bias, w_lin, b_lin, h0)

    y = jnp.transpose(y_tb)[..., None]             # (B, T, 1) wrapper-side layout plumbing
    return y, hT[None]                              # h: (n_layers=1, B, H)


def init_params(key, n_hidden=N_HIDDEN):
    """Deterministic init mimicking PyTorch's U(-1/sqrt(H), 1/sqrt(H))."""
    H = n_hidden
    ks = jax.random.split(key, 6)
    s_rnn = 1.0 / jnp.sqrt(H)
    s_lin = 1.0 / jnp.sqrt(25.0)
    u = lambda k, shape, s: jax.random.uniform(k, shape, jnp.float32, -s, s)
    return {
        "w_ih":  u(ks[0], (H, 1), s_rnn),
        "w_hh":  u(ks[1], (H, H), s_rnn),
        "b_ih":  u(ks[2], (1, H), s_rnn),
        "b_hh":  u(ks[3], (1, H), s_rnn),
        "w_lin": u(ks[4], (1, H), s_lin),
        "b_lin": u(ks[5], (1, 1), s_lin),
    }


def reference_forward(x, params, h=None):
    """Pure-JAX reference of the PyTorch forward (for verification)."""
    B, T, _ = x.shape
    H = N_HIDDEN
    h0 = jnp.zeros((B, H), jnp.float32) if h is None else h[0]

    def cell(h_prev, x_t):
        pre = (x_t @ params["w_ih"].T + params["b_ih"]
               + h_prev @ params["w_hh"].T + params["b_hh"])
        h_new = jnp.tanh(pre)
        return h_new, h_new

    x_tm = jnp.transpose(x, (1, 0, 2))          # (T, B, 1)
    hT, hs = lax.scan(cell, h0, x_tm)           # hs: (T, B, H)
    out = jnp.transpose(hs, (1, 0, 2))          # (B, T, H)
    y = jnp.tanh(out @ params["w_lin"].T + params["b_lin"][0])   # (B, T, 1)
    return y, hT[None]


if __name__ == "__main__":
    key = jax.random.PRNGKey(0)
    k_x, k_p = jax.random.split(key)

    B, T = 2, 8
    x = jax.random.normal(k_x, (B, T, 1), jnp.float32)
    params = init_params(k_p)

    y, h = model_forward(x, params)
    y = jax.block_until_ready(y)
    h = jax.block_until_ready(h)

    y_ref, h_ref = reference_forward(x, params)
    assert y.shape == (B, T, 1) and h.shape == (N_LAYERS, B, N_HIDDEN)
    assert jnp.allclose(y, y_ref, atol=1e-5, rtol=1e-5)
    assert jnp.allclose(h, h_ref, atol=1e-5, rtol=1e-5)

    print("KERNEL_OK")
</pallas_src>

<mosaic_0001>
module attributes {stable_mosaic.version = 11 : i64} {
  func.func @_rnn_kernel(%arg0: i32, %arg1: memref<8x2x1xf32, #tpu.memory_space<vmem>>, %arg2: memref<1x25xf32, #tpu.memory_space<vmem>>, %arg3: memref<25x25xf32, #tpu.memory_space<vmem>>, %arg4: memref<1x25xf32, #tpu.memory_space<vmem>>, %arg5: memref<1x25xf32, #tpu.memory_space<vmem>>, %arg6: memref<1x1xf32, #tpu.memory_space<vmem>>, %arg7: memref<2x25xf32, #tpu.memory_space<vmem>>, %arg8: memref<8x2xf32, #tpu.memory_space<vmem>>, %arg9: memref<2x25xf32, #tpu.memory_space<vmem>>, %arg10: memref<2x25xf32, #tpu.memory_space<vmem>>, %arg11: memref<8x2x25xf32, #tpu.memory_space<vmem>>) attributes {dimension_semantics = [#tpu.dimension_semantics<arbitrary>], iteration_bounds = array<i64: 1>, scalar_prefetch = 0 : i64, scratch_operands = 2 : i64, tpu.core_type = #tpu.core_type<tc>, window_params = [{transform_indices = @transform_0, window_bounds = array<i64: 8, 2, 1>}, {pipeline_mode = #tpu.pipeline_mode<synchronous>, transform_indices = @transform_1, window_bounds = array<i64: 1, 25>}, {pipeline_mode = #tpu.pipeline_mode<synchronous>, transform_indices = @transform_2, window_bounds = array<i64: 25, 25>}, {pipeline_mode = #tpu.pipeline_mode<synchronous>, transform_indices = @transform_3, window_bounds = array<i64: 1, 25>}, {pipeline_mode = #tpu.pipeline_mode<synchronous>, transform_indices = @transform_4, window_bounds = array<i64: 1, 25>}, {pipeline_mode = #tpu.pipeline_mode<synchronous>, transform_indices = @transform_5, window_bounds = array<i64: 1, 1>}, {pipeline_mode = #tpu.pipeline_mode<synchronous>, transform_indices = @transform_6, window_bounds = array<i64: 2, 25>}, {transform_indices = @transform_7, window_bounds = array<i64: 8, 2>}, {pipeline_mode = #tpu.pipeline_mode<synchronous>, transform_indices = @transform_8, window_bounds = array<i64: 2, 25>}]} {
    %c0_i32 = arith.constant 0 : i32
    %0 = arith.cmpi eq, %arg0, %c0_i32 : i32
    %1 = arith.extui %0 : i1 to i32
    %c0_i32_0 = arith.constant 0 : i32
    %2 = arith.cmpi ne, %1, %c0_i32_0 : i32
    scf.if %2 {
      %c0_62 = arith.constant 0 : index
      %c0_63 = arith.constant 0 : index
      %140 = vector.load %arg7[%c0_62, %c0_63] : memref<2x25xf32, #tpu.memory_space<vmem>>, vector<2x25xf32>
      %c0_64 = arith.constant 0 : index
      %c0_65 = arith.constant 0 : index
      %141 = vector.load %arg10[%c0_64, %c0_65] : memref<2x25xf32, #tpu.memory_space<vmem>>, vector<2x25xf32>
      tpu.vector_store %arg10[%c0_64, %c0_65], %140 {strides = array<i32>} : memref<2x25xf32, #tpu.memory_space<vmem>>, vector<2x25xf32>,
    } else {
    }
    %c0 = arith.constant 0 : index
    %c0_1 = arith.constant 0 : index
    %3 = vector.load %arg2[%c0, %c0_1] : memref<1x25xf32, #tpu.memory_space<vmem>>, vector<1x25xf32>
    %c0_2 = arith.constant 0 : index
    %c0_3 = arith.constant 0 : index
    %4 = vector.load %arg4[%c0_2, %c0_3] : memref<1x25xf32, #tpu.memory_space<vmem>>, vector<1x25xf32>
    %c0_4 = arith.constant 0 : index
    %c0_5 = arith.constant 0 : index
    %5 = vector.load %arg3[%c0_4, %c0_5] : memref<25x25xf32, #tpu.memory_space<vmem>>, vector<25x25xf32>
    %c0_6 = arith.constant 0 : index
    %c0_7 = arith.constant 0 : index
    %6 = vector.load %arg10[%c0_6, %c0_7] : memref<2x25xf32, #tpu.memory_space<vmem>>, vector<2x25xf32>
    %c0_i32_8 = arith.constant 0 : i32
    %7 = arith.index_cast %c0_i32_8 : i32 to index
    %c0_9 = arith.constant 0 : index
    %c0_10 = arith.constant 0 : index
    %8 = vector.load %arg1[%7, %c0_9, %c0_10] : memref<8x2x1xf32, #tpu.memory_space<vmem>>, vector<1x2x1xf32>
    %9 = vector.shape_cast %8 : vector<1x2x1xf32> to vector<2x1xf32>
    %10 = vector.broadcast %9 : vector<2x1xf32> to vector<2x25xf32>
    %11 = vector.broadcast %3 : vector<1x25xf32> to vector<2x25xf32>
    %12 = arith.mulf %10, %11 : vector<2x25xf32>
    %13 = vector.broadcast %4 : vector<1x25xf32> to vector<2x25xf32>
    %14 = arith.addf %12, %13 : vector<2x25xf32>
    %cst = arith.constant dense<0.000000e+00> : vector<2x25xf32>
    %15 = tpu.matmul %6, %5, %cst {dimension_numbers = #tpu.dot_dimension_numbers<[1], [0], [0], [1], [0, 0, 1, 1], [], []>} : vector<2x25xf32>, vector<25x25xf32>, vector<2x25xf32> -> vector<2x25xf32>
    %16 = arith.addf %14, %15 : vector<2x25xf32>
    %17 = math.tanh %16 : vector<2x25xf32>
    %18 = arith.index_cast %c0_i32_8 : i32 to index
    %c0_11 = arith.constant 0 : index
    %c0_12 = arith.constant 0 : index
    %19 = vector.load %arg11[%18, %c0_11, %c0_12] : memref<8x2x25xf32, #tpu.memory_space<vmem>>, vector<1x2x25xf32>
    %20 = vector.shape_cast %19 : vector<1x2x25xf32> to vector<2x25xf32>
    %21 = vector.shape_cast %17 : vector<2x25xf32> to vector<1x2x25xf32>
    tpu.vector_store %arg11[%18, %c0_11, %c0_12], %21 {strides = array<i32>} : memref<8x2x25xf32, #tpu.memory_space<vmem>>, vector<1x2x25xf32>,
    %c1_i32 = arith.constant 1 : i32
    %22 = arith.index_cast %c1_i32 : i32 to index
    %c0_13 = arith.constant 0 : index
    %c0_14 = arith.constant 0 : index
    %23 = vector.load %arg1[%22, %c0_13, %c0_14] : memref<8x2x1xf32, #tpu.memory_space<vmem>>, vector<1x2x1xf32>
    %24 = vector.shape_cast %23 : vector<1x2x1xf32> to vector<2x1xf32>
    %25 = vector.broadcast %24 : vector<2x1xf32> to vector<2x25xf32>
    %26 = vector.broadcast %3 : vector<1x25xf32> to vector<2x25xf32>
    %27 = arith.mulf %25, %26 : vector<2x25xf32>
    %28 = vector.broadcast %4 : vector<1x25xf32> to vector<2x25xf32>
    %29 = arith.addf %27, %28 : vector<2x25xf32>
    %cst_15 = arith.constant dense<0.000000e+00> : vector<2x25xf32>
    %30 = tpu.matmul %17, %5, %cst_15 {dimension_numbers = #tpu.dot_dimension_numbers<[1], [0], [0], [1], [0, 0, 1, 1], [], []>} : vector<2x25xf32>, vector<25x25xf32>, vector<2x25xf32> -> vector<2x25xf32>
    %31 = arith.addf %29, %30 : vector<2x25xf32>
    %32 = math.tanh %31 : vector<2x25xf32>
    %33 = arith.index_cast %c1_i32 : i32 to index
    %c0_16 = arith.constant 0 : index
    %c0_17 = arith.constant 0 : index
    %34 = vector.load %arg11[%33, %c0_16, %c0_17] : memref<8x2x25xf32, #tpu.memory_space<vmem>>, vector<1x2x25xf32>
    %35 = vector.shape_cast %34 : vector<1x2x25xf32> to vector<2x25xf32>
    %36 = vector.shape_cast %32 : vector<2x25xf32> to vector<1x2x25xf32>
    tpu.vector_store %arg11[%33, %c0_16, %c0_17], %36 {strides = array<i32>} : memref<8x2x25xf32, #tpu.memory_space<vmem>>, vector<1x2x25xf32>,
    %c2_i32 = arith.constant 2 : i32
    %37 = arith.index_cast %c2_i32 : i32 to index
    %c0_18 = arith.constant 0 : index
    %c0_19 = arith.constant 0 : index
    %38 = vector.load %arg1[%37, %c0_18, %c0_19] : memref<8x2x1xf32, #tpu.memory_space<vmem>>, vector<1x2x1xf32>
    %39 = vector.shape_cast %38 : vector<1x2x1xf32> to vector<2x1xf32>
    %40 = vector.broadcast %39 : vector<2x1xf32> to vector<2x25xf32>
    %41 = vector.broadcast %3 : vector<1x25xf32> to vector<2x25xf32>
    %42 = arith.mulf %40, %41 : vector<2x25xf32>
    %43 = vector.broadcast %4 : vector<1x25xf32> to vector<2x25xf32>
    %44 = arith.addf %42, %43 : vector<2x25xf32>
    %cst_20 = arith.constant dense<0.000000e+00> : vector<2x25xf32>
    %45 = tpu.matmul %32, %5, %cst_20 {dimension_numbers = #tpu.dot_dimension_numbers<[1], [0], [0], [1], [0, 0, 1, 1], [], []>} : vector<2x25xf32>, vector<25x25xf32>, vector<2x25xf32> -> vector<2x25xf32>
    %46 = arith.addf %44, %45 : vector<2x25xf32>
    %47 = math.tanh %46 : vector<2x25xf32>
    %48 = arith.index_cast %c2_i32 : i32 to index
    %c0_21 = arith.constant 0 : index
    %c0_22 = arith.constant 0 : index
    %49 = vector.load %arg11[%48, %c0_21, %c0_22] : memref<8x2x25xf32, #tpu.memory_space<vmem>>, vector<1x2x25xf32>
    %50 = vector.shape_cast %49 : vector<1x2x25xf32> to vector<2x25xf32>
    %51 = vector.shape_cast %47 : vector<2x25xf32> to vector<1x2x25xf32>
    tpu.vector_store %arg11[%48, %c0_21, %c0_22], %51 {strides = array<i32>} : memref<8x2x25xf32, #tpu.memory_space<vmem>>, vector<1x2x25xf32>,
    %c3_i32 = arith.constant 3 : i32
    %52 = arith.index_cast %c3_i32 : i32 to index
    %c0_23 = arith.constant 0 : index
    %c0_24 = arith.constant 0 : index
    %53 = vector.load %arg1[%52, %c0_23, %c0_24] : memref<8x2x1xf32, #tpu.memory_space<vmem>>, vector<1x2x1xf32>
    %54 = vector.shape_cast %53 : vector<1x2x1xf32> to vector<2x1xf32>
    %55 = vector.broadcast %54 : vector<2x1xf32> to vector<2x25xf32>
    %56 = vector.broadcast %3 : vector<1x25xf32> to vector<2x25xf32>
    %57 = arith.mulf %55, %56 : vector<2x25xf32>
    %58 = vector.broadcast %4 : vector<1x25xf32> to vector<2x25xf32>
    %59 = arith.addf %57, %58 : vector<2x25xf32>
    %cst_25 = arith.constant dense<0.000000e+00> : vector<2x25xf32>
    %60 = tpu.matmul %47, %5, %cst_25 {dimension_numbers = #tpu.dot_dimension_numbers<[1], [0], [0], [1], [0, 0, 1, 1], [], []>} : vector<2x25xf32>, vector<25x25xf32>, vector<2x25xf32> -> vector<2x25xf32>
    %61 = arith.addf %59, %60 : vector<2x25xf32>
    %62 = math.tanh %61 : vector<2x25xf32>
    %63 = arith.index_cast %c3_i32 : i32 to index
    %c0_26 = arith.constant 0 : index
    %c0_27 = arith.constant 0 : index
    %64 = vector.load %arg11[%63, %c0_26, %c0_27] : memref<8x2x25xf32, #tpu.memory_space<vmem>>, vector<1x2x25xf32>
    %65 = vector.shape_cast %64 : vector<1x2x25xf32> to vector<2x25xf32>
    %66 = vector.shape_cast %62 : vector<2x25xf32> to vector<1x2x25xf32>
    tpu.vector_store %arg11[%63, %c0_26, %c0_27], %66 {strides = array<i32>} : memref<8x2x25xf32, #tpu.memory_space<vmem>>, vector<1x2x25xf32>,
    %c4_i32 = arith.constant 4 : i32
    %67 = arith.index_cast %c4_i32 : i32 to index
    %c0_28 = arith.constant 0 : index
    %c0_29 = arith.constant 0 : index
    %68 = vector.load %arg1[%67, %c0_28, %c0_29] : memref<8x2x1xf32, #tpu.memory_space<vmem>>, vector<1x2x1xf32>
    %69 = vector.shape_cast %68 : vector<1x2x1xf32> to vector<2x1xf32>
    %70 = vector.broadcast %69 : vector<2x1xf32> to vector<2x25xf32>
    %71 = vector.broadcast %3 : vector<1x25xf32> to vector<2x25xf32>
    %72 = arith.mulf %70, %71 : vector<2x25xf32>
    %73 = vector.broadcast %4 : vector<1x25xf32> to vector<2x25xf32>
    %74 = arith.addf %72, %73 : vector<2x25xf32>
    %cst_30 = arith.constant dense<0.000000e+00> : vector<2x25xf32>
    %75 = tpu.matmul %62, %5, %cst_30 {dimension_numbers = #tpu.dot_dimension_numbers<[1], [0], [0], [1], [0, 0, 1, 1], [], []>} : vector<2x25xf32>, vector<25x25xf32>, vector<2x25xf32> -> vector<2x25xf32>
    %76 = arith.addf %74, %75 : vector<2x25xf32>
    %77 = math.tanh %76 : vector<2x25xf32>
    %78 = arith.index_cast %c4_i32 : i32 to index
    %c0_31 = arith.constant 0 : index
    %c0_32 = arith.constant 0 : index
    %79 = vector.load %arg11[%78, %c0_31, %c0_32] : memref<8x2x25xf32, #tpu.memory_space<vmem>>, vector<1x2x25xf32>
    %80 = vector.shape_cast %79 : vector<1x2x25xf32> to vector<2x25xf32>
    %81 = vector.shape_cast %77 : vector<2x25xf32> to vector<1x2x25xf32>
    tpu.vector_store %arg11[%78, %c0_31, %c0_32], %81 {strides = array<i32>} : memref<8x2x25xf32, #tpu.memory_space<vmem>>, vector<1x2x25xf32>,
    %c5_i32 = arith.constant 5 : i32
    %82 = arith.index_cast %c5_i32 : i32 to index
    %c0_33 = arith.constant 0 : index
    %c0_34 = arith.constant 0 : index
    %83 = vector.load %arg1[%82, %c0_33, %c0_34] : memref<8x2x1xf32, #tpu.memory_space<vmem>>, vector<1x2x1xf32>
    %84 = vector.shape_cast %83 : vector<1x2x1xf32> to vector<2x1xf32>
    %85 = vector.broadcast %84 : vector<2x1xf32> to vector<2x25xf32>
    %86 = vector.broadcast %3 : vector<1x25xf32> to vector<2x25xf32>
    %87 = arith.mulf %85, %86 : vector<2x25xf32>
    %88 = vector.broadcast %4 : vector<1x25xf32> to vector<2x25xf32>
    %89 = arith.addf %87, %88 : vector<2x25xf32>
    %cst_35 = arith.constant dense<0.000000e+00> : vector<2x25xf32>
    %90 = tpu.matmul %77, %5, %cst_35 {dimension_numbers = #tpu.dot_dimension_numbers<[1], [0], [0], [1], [0, 0, 1, 1], [], []>} : vector<2x25xf32>, vector<25x25xf32>, vector<2x25xf32> -> vector<2x25xf32>
    %91 = arith.addf %89, %90 : vector<2x25xf32>
    %92 = math.tanh %91 : vector<2x25xf32>
    %93 = arith.index_cast %c5_i32 : i32 to index
    %c0_36 = arith.constant 0 : index
    %c0_37 = arith.constant 0 : index
    %94 = vector.load %arg11[%93, %c0_36, %c0_37] : memref<8x2x25xf32, #tpu.memory_space<vmem>>, vector<1x2x25xf32>
    %95 = vector.shape_cast %94 : vector<1x2x25xf32> to vector<2x25xf32>
    %96 = vector.shape_cast %92 : vector<2x25xf32> to vector<1x2x25xf32>
    tpu.vector_store %arg11[%93, %c0_36, %c0_37], %96 {strides = array<i32>} : memref<8x2x25xf32, #tpu.memory_space<vmem>>, vector<1x2x25xf32>,
    %c6_i32 = arith.constant 6 : i32
    %97 = arith.index_cast %c6_i32 : i32 to index
    %c0_38 = arith.constant 0 : index
    %c0_39 = arith.constant 0 : index
    %98 = vector.load %arg1[%97, %c0_38, %c0_39] : memref<8x2x1xf32, #tpu.memory_space<vmem>>, vector<1x2x1xf32>
    %99 = vector.shape_cast %98 : vector<1x2x1xf32> to vector<2x1xf32>
    %100 = vector.broadcast %99 : vector<2x1xf32> to vector<2x25xf32>
    %101 = vector.broadcast %3 : vector<1x25xf32> to vector<2x25xf32>
    %102 = arith.mulf %100, %101 : vector<2x25xf32>
    %103 = vector.broadcast %4 : vector<1x25xf32> to vector<2x25xf32>
    %104 = arith.addf %102, %103 : vector<2x25xf32>
    %cst_40 = arith.constant dense<0.000000e+00> : vector<2x25xf32>
    %105 = tpu.matmul %92, %5, %cst_40 {dimension_numbers = #tpu.dot_dimension_numbers<[1], [0], [0], [1], [0, 0, 1, 1], [], []>} : vector<2x25xf32>, vector<25x25xf32>, vector<2x25xf32> -> vector<2x25xf32>
    %106 = arith.addf %104, %105 : vector<2x25xf32>
    %107 = math.tanh %106 : vector<2x25xf32>
    %108 = arith.index_cast %c6_i32 : i32 to index
    %c0_41 = arith.constant 0 : index
    %c0_42 = arith.constant 0 : index
    %109 = vector.load %arg11[%108, %c0_41, %c0_42] : memref<8x2x25xf32, #tpu.memory_space<vmem>>, vector<1x2x25xf32>
    %110 = vector.shape_cast %109 : vector<1x2x25xf32> to vector<2x25xf32>
    %111 = vector.shape_cast %107 : vector<2x25xf32> to vector<1x2x25xf32>
    tpu.vector_store %arg11[%108, %c0_41, %c0_42], %111 {strides = array<i32>} : memref<8x2x25xf32, #tpu.memory_space<vmem>>, vector<1x2x25xf32>,
    %c7_i32 = arith.constant 7 : i32
    %112 = arith.index_cast %c7_i32 : i32 to index
    %c0_43 = arith.constant 0 : index
    %c0_44 = arith.constant 0 : index
    %113 = vector.load %arg1[%112, %c0_43, %c0_44] : memref<8x2x1xf32, #tpu.memory_space<vmem>>, vector<1x2x1xf32>
    %114 = vector.shape_cast %113 : vector<1x2x1xf32> to vector<2x1xf32>
    %115 = vector.broadcast %114 : vector<2x1xf32> to vector<2x25xf32>
    %116 = vector.broadcast %3 : vector<1x25xf32> to vector<2x25xf32>
    %117 = arith.mulf %115, %116 : vector<2x25xf32>
    %118 = vector.broadcast %4 : vector<1x25xf32> to vector<2x25xf32>
    %119 = arith.addf %117, %118 : vector<2x25xf32>
    %cst_45 = arith.constant dense<0.000000e+00> : vector<2x25xf32>
    %120 = tpu.matmul %107, %5, %cst_45 {dimension_numbers = #tpu.dot_dimension_numbers<[1], [0], [0], [1], [0, 0, 1, 1], [], []>} : vector<2x25xf32>, vector<25x25xf32>, vector<2x25xf32> -> vector<2x25xf32>
    %121 = arith.addf %119, %120 : vector<2x25xf32>
    %122 = math.tanh %121 : vector<2x25xf32>
    %123 = arith.index_cast %c7_i32 : i32 to index
    %c0_46 = arith.constant 0 : index
    %c0_47 = arith.constant 0 : index
    %124 = vector.load %arg11[%123, %c0_46, %c0_47] : memref<8x2x25xf32, #tpu.memory_space<vmem>>, vector<1x2x25xf32>
    %125 = vector.shape_cast %124 : vector<1x2x25xf32> to vector<2x25xf32>
    %126 = vector.shape_cast %122 : vector<2x25xf32> to vector<1x2x25xf32>
    tpu.vector_store %arg11[%123, %c0_46, %c0_47], %126 {strides = array<i32>} : memref<8x2x25xf32, #tpu.memory_space<vmem>>, vector<1x2x25xf32>,
    %c8_i32 = arith.constant 8 : i32
    %c0_48 = arith.constant 0 : index
    %c0_49 = arith.constant 0 : index
    %127 = vector.load %arg10[%c0_48, %c0_49] : memref<2x25xf32, #tpu.memory_space<vmem>>, vector<2x25xf32>
    tpu.vector_store %arg10[%c0_48, %c0_49], %122 {strides = array<i32>} : memref<2x25xf32, #tpu.memory_space<vmem>>, vector<2x25xf32>,
    %c0_50 = arith.constant 0 : index
    %c0_51 = arith.constant 0 : index
    %128 = vector.load %arg9[%c0_50, %c0_51] : memref<2x25xf32, #tpu.memory_space<vmem>>, vector<2x25xf32>
    tpu.vector_store %arg9[%c0_50, %c0_51], %122 {strides = array<i32>} : memref<2x25xf32, #tpu.memory_space<vmem>>, vector<2x25xf32>,
    %c0_52 = arith.constant 0 : index
    %c0_53 = arith.constant 0 : index
    %c0_54 = arith.constant 0 : index
    %129 = vector.load %arg11[%c0_52, %c0_53, %c0_54] : memref<8x2x25xf32, #tpu.memory_space<vmem>>, vector<8x2x25xf32>
    %c0_55 = arith.constant 0 : index
    %c0_56 = arith.constant 0 : index
    %130 = vector.load %arg5[%c0_55, %c0_56] : memref<1x25xf32, #tpu.memory_space<vmem>>, vector<1x25xf32>
    %131 = vector.shape_cast %130 : vector<1x25xf32> to vector<1x1x25xf32>
    %132 = vector.broadcast %131 : vector<1x1x25xf32> to vector<8x2x25xf32>
    %133 = arith.mulf %129, %132 : vector<8x2x25xf32>
    %cst_57 = arith.constant dense<0.000000e+00> : vector<8x2xf32>
    %134 = vector.multi_reduction <add>, %133, %cst_57 [2] : vector<8x2x25xf32> to vector<8x2xf32>
    %c0_58 = arith.constant 0 : index
    %c0_59 = arith.constant 0 : index
    %135 = vector.load %arg6[%c0_58, %c0_59] : memref<1x1xf32, #tpu.memory_space<vmem>>, vector<1x1xf32>
    %136 = vector.broadcast %135 : vector<1x1xf32> to vector<8x2xf32>
    %137 = arith.addf %134, %136 : vector<8x2xf32>
    %138 = math.tanh %137 : vector<8x2xf32>
    %c0_60 = arith.constant 0 : index
    %c0_61 = arith.constant 0 : index
    %139 = vector.load %arg8[%c0_60, %c0_61] : memref<8x2xf32, #tpu.memory_space<vmem>>, vector<8x2xf32>
    tpu.vector_store %arg8[%c0_60, %c0_61], %138 {strides = array<i32>} : memref<8x2xf32, #tpu.memory_space<vmem>>, vector<8x2xf32>,
    return
  }
  func.func @transform_0(%arg0: i32) -> (i32, i32, i32) {
    %c0_i32 = arith.constant 0 : i32
    %c0_i32_0 = arith.constant 0 : i32
    %c0_i32_1 = arith.constant 0 : i32
    return %arg0, %c0_i32, %c0_i32_0 : i32, i32, i32
  }
  func.func @transform_1(%arg0: i32) -> (i32, i32) {
    %c0_i32 = arith.constant 0 : i32
    %c0_i32_0 = arith.constant 0 : i32
    %c0_i32_1 = arith.constant 0 : i32
    return %c0_i32, %c0_i32_0 : i32, i32
  }
  func.func @transform_2(%arg0: i32) -> (i32, i32) {
    %c0_i32 = arith.constant 0 : i32
    %c0_i32_0 = arith.constant 0 : i32
    %c0_i32_1 = arith.constant 0 : i32
    return %c0_i32, %c0_i32_0 : i32, i32
  }
  func.func @transform_3(%arg0: i32) -> (i32, i32) {
    %c0_i32 = arith.constant 0 : i32
    %c0_i32_0 = arith.constant 0 : i32
    %c0_i32_1 = arith.constant 0 : i32
    return %c0_i32, %c0_i32_0 : i32, i32
  }
  func.func @transform_4(%arg0: i32) -> (i32, i32) {
    %c0_i32 = arith.constant 0 : i32
    %c0_i32_0 = arith.constant 0 : i32
    %c0_i32_1 = arith.constant 0 : i32
    return %c0_i32, %c0_i32_0 : i32, i32
  }
  func.func @transform_5(%arg0: i32) -> (i32, i32) {
    %c0_i32 = arith.constant 0 : i32
    %c0_i32_0 = arith.constant 0 : i32
    %c0_i32_1 = arith.constant 0 : i32
    return %c0_i32, %c0_i32_0 : i32, i32
  }
  func.func @transform_6(%arg0: i32) -> (i32, i32) {
    %c0_i32 = arith.constant 0 : i32
    %c0_i32_0 = arith.constant 0 : i32
    %c0_i32_1 = arith.constant 0 : i32
    return %c0_i32, %c0_i32_0 : i32, i32
  }
  func.func @transform_7(%arg0: i32) -> (i32, i32) {
    %c0_i32 = arith.constant 0 : i32
    %c0_i32_0 = arith.constant 0 : i32
    return %arg0, %c0_i32 : i32, i32
  }
  func.func @transform_8(%arg0: i32) -> (i32, i32) {
    %c0_i32 = arith.constant 0 : i32
    %c0_i32_0 = arith.constant 0 : i32
    %c0_i32_1 = arith.constant 0 : i32
    return %c0_i32, %c0_i32_0 : i32, i32
  }
}

</mosaic_0001>

<llo_original>
// kernel: tpu_custom_call.1
$region0: #{tpu_custom_call.1}
  #allocation0 [shape = 'u32[]', space=smem, size = 0x4, offset = 0x4, fixed_abs, tag = 'smem constant byte address 0x4 - core index']
  #allocation1 [shape = 'u32[144,128]{1,0:T(1,128)}', space=vmem, size = 0x12000, scoped, tag = 'internal scratch']
  #allocation2 [shape = 'f32[2,25]{1,0:T(2,128)}', space=vmem, size = 0x400, scoped, tag = 'scratch operand']
  #allocation3 [shape = 'f32[8,2,25]{2,1,0:T(2,128)}', space=vmem, size = 0x2000, scoped, tag = 'scratch operand']
  #allocation4 [shape = 'f32[1,1]{1,0:T(1,128)S(1)}', space=vmem, size = 0x200, scoped, tag = 'scoped memory for tpu_custom_call.1']
  %s0 = inlined_call_operand.vmem [shape: f32[8,2,1], index: 0, kind: input, shape index: {}]
  %s1 = inlined_call_operand.vmem [shape: f32[1,25], index: 1, kind: input, shape index: {}]
  %s2 = inlined_call_operand.vmem [shape: f32[25,25], index: 2, kind: input, shape index: {}]
  %s3 = inlined_call_operand.vmem [shape: f32[1,25], index: 3, kind: input, shape index: {}]
  %s4 = inlined_call_operand.vmem [shape: f32[1,25], index: 4, kind: input, shape index: {}]
  %s5 = inlined_call_operand.<no memory space> [shape: f32[1,1], index: 5, kind: input, shape index: {}]
  %s6 = inlined_call_operand.vmem [shape: f32[2,25], index: 6, kind: input, shape index: {}, may-alias: {6,8}]
  %s7 = inlined_call_operand.vmem [shape: f32[8,2], index: 7, kind: output, shape index: {0}]
  %s8 = inlined_call_operand.vmem [shape: f32[2,25], index: 8, kind: output, shape index: {1}, may-alias: {6,8}]
  %9 = xla_tuple %s7, %s8
  %s10 = sld [smem:[#allocation0]]
  $region50: #{tpu_custom_call.1} parent=0
    _
  %s12 = ssub.s32 1, %s10
  %s13 = scalar_select 0, %s12, %s10
  %v14 = vstv %s5
  %15 = vst [vmem:[#allocation4] sm:$0x1] %v14
  // Predicated region
  $region2: #{tpu_custom_call.1} parent=0 // pred_check
    _
  $region3: #{tpu_custom_call.1} parent=0 // pred_check_branch
    %17 = sbr.rel (0) target = $region5
  $region4: #{tpu_custom_call.1} parent=0 // pred_region
    _
  $region5: #{tpu_custom_call.1} parent=0 // pred_fallthru
    _
  // Predicated region
  $region6: #{tpu_custom_call.1} parent=0 // pred_check
    _
  $region7: #{tpu_custom_call.1} parent=0 // pred_check_branch
    %19 = sbr.rel (0) target = $region9
  $region8: #{tpu_custom_call.1} parent=0 // pred_region
    _
  $region9: #{tpu_custom_call.1} parent=0 // pred_fallthru
    _
  // Predicated region
  $region10: #{tpu_custom_call.1} parent=0 // pred_check
    _
  $region11: #{tpu_custom_call.1} parent=0 // pred_check_branch
    %21 = sbr.rel (0) target = $region13
  $region12: #{tpu_custom_call.1} parent=0 // pred_region
    _
  $region13: #{tpu_custom_call.1} parent=0 // pred_fallthru
    _
  // Predicated region
  $region14: #{tpu_custom_call.1} parent=0 // pred_check
    _
  $region15: #{tpu_custom_call.1} parent=0 // pred_check_branch
    %23 = sbr.rel (0) target = $region17
  $region16: #{tpu_custom_call.1} parent=0 // pred_region
    _
  $region17: #{tpu_custom_call.1} parent=0 // pred_fallthru
    _
  // Predicated region
  $region18: #{tpu_custom_call.1} parent=0 // pred_check
    _
  $region19: #{tpu_custom_call.1} parent=0 // pred_check_branch
    %25 = sbr.rel (0) target = $region21
  $region20: #{tpu_custom_call.1} parent=0 // pred_region
    _
  $region21: #{tpu_custom_call.1} parent=0 // pred_fallthru
    _
  // Predicated region
  $region22: #{tpu_custom_call.1} parent=0 // pred_check
    _
  $region23: #{tpu_custom_call.1} parent=0 // pred_check_branch
    %27 = sbr.rel (0) target = $region25
  $region24: #{tpu_custom_call.1} parent=0 // pred_region
    _
  $region25: #{tpu_custom_call.1} parent=0 // pred_fallthru
    _
  // Predicated region
  $region26: #{tpu_custom_call.1} parent=0 // pred_check
    _
  $region27: #{tpu_custom_call.1} parent=0 // pred_check_branch
    %29 = sbr.rel (0) target = $region29
  $region28: #{tpu_custom_call.1} parent=0 // pred_region
    _
  $region29: #{tpu_custom_call.1} parent=0 // pred_fallthru
    _
  %p30 = scmp.eq.s32.totalorder 0, 0
  // Predicated region
  $region30: #{tpu_custom_call.1} parent=0 // pred_check
    %p31 = pneg %p30
  $region31: #{tpu_custom_call.1} parent=0 // pred_check_branch
    %33 = sbr.rel (%p31) target = $region33
  $region32: #{tpu_custom_call.1} parent=0 // pred_region
    %v34 = vld [vmem:[%s6] sm:$0x3]
    %vm35 = vcmask 197632
    %36 = vst.msk [vmem:[#allocation2] sm:$0x3] %vm35, %v34
  $region33: #{tpu_custom_call.1} parent=0 // pred_fallthru
    _
  %v37 = vld [vmem:[%s1] sm:$0x1]
  %v38 = vld [vmem:[%s3] sm:$0x1]
  %v39 = vld [vmem:[%s2] sm:$0xff]
  %v40 = vld [vmem:[%s2 + $0x8] sm:$0xff]
  %v41 = vld [vmem:[%s2 + $0x10] sm:$0xff]
  %v42 = vld [vmem:[%s2 + $0x18] sm:$0x1]
  %v43 = vld [vmem:[#allocation2] sm:$0x3]
  %v44 = vld [vmem:[%s0] sm:$0x3]
  %46 = vset.pattern.permute.xlu0 0
  %47 = vperm.xlu0 %46, %v44
  %v48 = vpop.permute.xlu0 %47
  %v51 = vlaneseq
  %v52 = vshrl.u32 %v51, 7
  %v53 = vsub.s32 0, %v52
  %v54 = vrot.slane %v37, %v53
  %v56 = vmul.f32 %v48, %v54
  %v58 = vlaneseq
  %v59 = vshrl.u32 %v58, 7
  %v60 = vsub.s32 0, %v59
  %v61 = vrot.slane %v38, %v60
  %v63 = vadd.f32 %v56, %v61
  %vm64 = vcmask 203776
  %v66 = vsel %vm64, %v43, 0
  %vm68 = vcmask 1040384
  %v70 = vsel %vm68, %v42, 0
  %72 = vmatprep.subr.mxu0 0.0
  %73 = vmatpush1.msra.mxu0 %v39
  %74 = vmatprep.subr.mxu0 0.0
  %75 = vmatpush1.msra.mxu0 %v40
  %76 = vmatprep.subr.mxu0 0.0
  %77 = vmatpush1.msra.mxu0 %v41
  %78 = vmatprep.subr.mxu0 0.0
  %79 = vmatpush1.msra.mxu0 %v70
  %80 = vmatprep.subr.mxu0 0.0
  %81 = vmatpush1.msra.mxu0 0.0
  %82 = vmatprep.subr.mxu0 0.0
  %83 = vmatpush1.msra.mxu0 0.0
  %84 = vmatprep.subr.mxu0 0.0
  %85 = vmatpush1.msra.mxu0 0.0
  %86 = vmatprep.subr.mxu0 0.0
  %87 = vmatpush1.msra.mxu0 0.0
  %88 = vmatprep.subr.mxu0 0.0
  %89 = vmatpush1.msra.mxu0 0.0
  %90 = vmatprep.subr.mxu0 0.0
  %91 = vmatpush1.msra.mxu0 0.0
  %92 = vmatprep.subr.mxu0 0.0
  %93 = vmatpush1.msra.mxu0 0.0
  %94 = vmatprep.subr.mxu0 0.0
  %95 = vmatpush1.msra.mxu0 0.0
  %96 = vmatprep.subr.mxu0 0.0
  %97 = vmatpush1.msra.mxu0 0.0
  %98 = vmatprep.subr.mxu0 0.0
  %99 = vmatpush1.msra.mxu0 0.0
  %100 = vmatprep.subr.mxu0 0.0
  %101 = vmatpush1.msra.mxu0 0.0
  %102 = vmatprep.subr.mxu0 0.0
  %103 = vmatpush1.msra.mxu0 0.0
  %104 = vmatprep.subr.mxu0 0.0
  %105 = vmatpush1.msra.mxu0 0.0
  %106 = vmatprep.subr.mxu0 0.0
  %107 = vmatpush1.msra.mxu0 0.0
  %108 = vmatprep.subr.mxu0 0.0
  %109 = vmatpush1.msra.mxu0 0.0
  %110 = vmatprep.subr.mxu0 0.0
  %111 = vmatpush1.msra.mxu0 0.0
  %112 = vmatprep.subr.mxu0 0.0
  %113 = vmatpush1.msra.mxu0 0.0
  %114 = vmatprep.subr.mxu0 0.0
  %115 = vmatpush1.msra.mxu0 0.0
  %116 = vmatprep.subr.mxu0 0.0
  %117 = vmatpush1.msra.mxu0 0.0
  %118 = vmatprep.subr.mxu0 0.0
  %119 = vmatpush1.msra.mxu0 0.0
  %120 = vmatprep.subr.mxu0 0.0
  %121 = vmatpush1.msra.mxu0 0.0
  %122 = vmatprep.subr.mxu0 0.0
  %123 = vmatpush1.msra.mxu0 0.0
  %124 = vmatprep.subr.mxu0 0.0
  %125 = vmatpush1.msra.mxu0 0.0
  %126 = vmatprep.subr.mxu0 0.0
  %127 = vmatpush1.msra.mxu0 0.0
  %128 = vmatprep.subr.mxu0 0.0
  %129 = vmatpush1.msra.mxu0 0.0
  %130 = vmatprep.subr.mxu0 0.0
  %131 = vmatpush1.msra.mxu0 0.0
  %132 = vmatprep.subr.mxu0 0.0
  %133 = vmatpush1.msra.mxu0 0.0
  %134 = vmatprep.subr.mxu0 0.0
  %135 = vmatpush1.msra.mxu0 0.0
  %136 = vmatprep.mubr.f32.mxu0 0.0
  %137 = vmatmul.mubr.f32.gmra.mrb[0].mxu0 %v66
  %v138 = vpop.f32.mrb[0].mxu0
  %v139 = vadd.f32 0.0, %v138
  %v140 = vpop.f32.mrb[0].mxu0
  %141 = vdwg.mxu0
  %v142 = vadd.f32 %v63, %v139
  %v143 = vtanh.pop %v142
  %vm144 = vcmask 197632
  %145 = vst.msk [vmem:[#allocation3] sm:$0x3] %vm144, %v143
  %s146 = scalar_lea.vmem %s0, 2
  %v147 = vld [vmem:[%s146] sm:$0x3]
  %149 = vset.pattern.permute.xlu0 0
  %150 = vperm.xlu0 %149, %v147
  %v151 = vpop.permute.xlu0 %150
  %v153 = vmul.f32 %v151, %v54
  %v154 = vadd.f32 %v153, %v61
  %v156 = vsel %vm64, %v143, 0
  %158 = vmatprep.subr.mxu0 0.0
  %159 = vmatpush1.msra.mxu0 %v39
  %160 = vmatprep.subr.mxu0 0.0
  %161 = vmatpush1.msra.mxu0 %v40
  %162 = vmatprep.subr.mxu0 0.0
  %163 = vmatpush1.msra.mxu0 %v41
  %164 = vmatprep.subr.mxu0 0.0
  %165 = vmatpush1.msra.mxu0 %v70
  %166 = vmatprep.subr.mxu0 0.0
  %167 = vmatpush1.msra.mxu0 0.0
  %168 = vmatprep.subr.mxu0 0.0
  %169 = vmatpush1.msra.mxu0 0.0
  %170 = vmatprep.subr.mxu0 0.0
  %171 = vmatpush1.msra.mxu0 0.0
  %172 = vmatprep.subr.mxu0 0.0
  %173 = vmatpush1.msra.mxu0 0.0
  %174 = vmatprep.subr.mxu0 0.0
  %175 = vmatpush1.msra.mxu0 0.0
  %176 = vmatprep.subr.mxu0 0.0
  %177 = vmatpush1.msra.mxu0 0.0
  %178 = vmatprep.subr.mxu0 0.0
  %179 = vmatpush1.msra.mxu0 0.0
  %180 = vmatprep.subr.mxu0 0.0
  %181 = vmatpush1.msra.mxu0 0.0
  %182 = vmatprep.subr.mxu0 0.0
  %183 = vmatpush1.msra.mxu0 0.0
  %184 = vmatprep.subr.mxu0 0.0
  %185 = vmatpush1.msra.mxu0 0.0
  %186 = vmatprep.subr.mxu0 0.0
  %187 = vmatpush1.msra.mxu0 0.0
  %188 = vmatprep.subr.mxu0 0.0
  %189 = vmatpush1.msra.mxu0 0.0
  %190 = vmatprep.subr.mxu0 0.0
  %191 = vmatpush1.msra.mxu0 0.0
  %192 = vmatprep.subr.mxu0 0.0
  %193 = vmatpush1.msra.mxu0 0.0
  %194 = vmatprep.subr.mxu0 0.0
  %195 = vmatpush1.msra.mxu0 0.0
  %196 = vmatprep.subr.mxu0 0.0
  %197 = vmatpush1.msra.mxu0 0.0
  %198 = vmatprep.subr.mxu0 0.0
  %199 = vmatpush1.msra.mxu0 0.0
  %200 = vmatprep.subr.mxu0 0.0
  %201 = vmatpush1.msra.mxu0 0.0
  %202 = vmatprep.subr.mxu0 0.0
  %203 = vmatpush1.msra.mxu0 0.0
  %204 = vmatprep.subr.mxu0 0.0
  %205 = vmatpush1.msra.mxu0 0.0
  %206 = vmatprep.subr.mxu0 0.0
  %207 = vmatpush1.msra.mxu0 0.0
  %208 = vmatprep.subr.mxu0 0.0
  %209 = vmatpush1.msra.mxu0 0.0
  %210 = vmatprep.subr.mxu0 0.0
  %211 = vmatpush1.msra.mxu0 0.0
  %212 = vmatprep.subr.mxu0 0.0
  %213 = vmatpush1.msra.mxu0 0.0
  %214 = vmatprep.subr.mxu0 0.0
  %215 = vmatpush1.msra.mxu0 0.0
  %216 = vmatprep.subr.mxu0 0.0
  %217 = vmatpush1.msra.mxu0 0.0
  %218 = vmatprep.subr.mxu0 0.0
  %219 = vmatpush1.msra.mxu0 0.0
  %220 = vmatprep.subr.mxu0 0.0
  %221 = vmatpush1.msra.mxu0 0.0
  %222 = vmatprep.mubr.f32.mxu0 0.0
  %223 = vmatmul.mubr.f32.gmra.mrb[0].mxu0 %v156
  %v224 = vpop.f32.mrb[0].mxu0
  %v225 = vadd.f32 0.0, %v224
  %v226 = vpop.f32.mrb[0].mxu0
  %227 = vdwg.mxu0
  %v228 = vadd.f32 %v154, %v225
  %v229 = vtanh.pop %v228
  %s230 = scalar_lea.vmem [#allocation3], 2
  %231 = vst.msk [vmem:[%s230] sm:$0x3] %vm144, %v229
  %s232 = scalar_lea.vmem %s0, 4
  %v233 = vld [vmem:[%s232] sm:$0x3]
  %235 = vset.pattern.permute.xlu0 0
  %236 = vperm.xlu0 %235, %v233
  %v237 = vpop.permute.xlu0 %236
  %v239 = vmul.f32 %v237, %v54
  %v240 = vadd.f32 %v239, %v61
  %v242 = vsel %vm64, %v229, 0
  %244 = vmatprep.subr.mxu0 0.0
  %245 = vmatpush1.msra.mxu0 %v39
  %246 = vmatprep.subr.mxu0 0.0
  %247 = vmatpush1.msra.mxu0 %v40
  %248 = vmatprep.subr.mxu0 0.0
  %249 = vmatpush1.msra.mxu0 %v41
  %250 = vmatprep.subr.mxu0 0.0
  %251 = vmatpush1.msra.mxu0 %v70
  %252 = vmatprep.subr.mxu0 0.0
  %253 = vmatpush1.msra.mxu0 0.0
  %254 = vmatprep.subr.mxu0 0.0
  %255 = vmatpush1.msra.mxu0 0.0
  %256 = vmatprep.subr.mxu0 0.0
  %257 = vmatpush1.msra.mxu0 0.0
  %258 = vmatprep.subr.mxu0 0.0
  %259 = vmatpush1.msra.mxu0 0.0
  %260 = vmatprep.subr.mxu0 0.0
  %261 = vmatpush1.msra.mxu0 0.0
  %262 = vmatprep.subr.mxu0 0.0
  %263 = vmatpush1.msra.mxu0 0.0
  %264 = vmatprep.subr.mxu0 0.0
  %265 = vmatpush1.msra.mxu0 0.0
  %266 = vmatprep.subr.mxu0 0.0
  %267 = vmatpush1.msra.mxu0 0.0
  %268 = vmatprep.subr.mxu0 0.0
  %269 = vmatpush1.msra.mxu0 0.0
  %270 = vmatprep.subr.mxu0 0.0
  %271 = vmatpush1.msra.mxu0 0.0
  %272 = vmatprep.subr.mxu0 0.0
  %273 = vmatpush1.msra.mxu0 0.0
  %274 = vmatprep.subr.mxu0 0.0
  %275 = vmatpush1.msra.mxu0 0.0
  %276 = vmatprep.subr.mxu0 0.0
  %277 = vmatpush1.msra.mxu0 0.0
  %278 = vmatprep.subr.mxu0 0.0
  %279 = vmatpush1.msra.mxu0 0.0
  %280 = vmatprep.subr.mxu0 0.0
  %281 = vmatpush1.msra.mxu0 0.0
  %282 = vmatprep.subr.mxu0 0.0
  %283 = vmatpush1.msra.mxu0 0.0
  %284 = vmatprep.subr.mxu0 0.0
  %285 = vmatpush1.msra.mxu0 0.0
  %286 = vmatprep.subr.mxu0 0.0
  %287 = vmatpush1.msra.mxu0 0.0
  %288 = vmatprep.subr.mxu0 0.0
  %289 = vmatpush1.msra.mxu0 0.0
  %290 = vmatprep.subr.mxu0 0.0
  %291 = vmatpush1.msra.mxu0 0.0
  %292 = vmatprep.subr.mxu0 0.0
  %293 = vmatpush1.msra.mxu0 0.0
  %294 = vmatprep.subr.mxu0 0.0
  %295 = vmatpush1.msra.mxu0 0.0
  %296 = vmatprep.subr.mxu0 0.0
  %297 = vmatpush1.msra.mxu0 0.0
  %298 = vmatprep.subr.mxu0 0.0
  %299 = vmatpush1.msra.mxu0 0.0
  %300 = vmatprep.subr.mxu0 0.0
  %301 = vmatpush1.msra.mxu0 0.0
  %302 = vmatprep.subr.mxu0 0.0
  %303 = vmatpush1.msra.mxu0 0.0
  %304 = vmatprep.subr.mxu0 0.0
  %305 = vmatpush1.msra.mxu0 0.0
  %306 = vmatprep.subr.mxu0 0.0
  %307 = vmatpush1.msra.mxu0 0.0
  %308 = vmatprep.mubr.f32.mxu0 0.0
  %309 = vmatmul.mubr.f32.gmra.mrb[0].mxu0 %v242
  %v310 = vpop.f32.mrb[0].mxu0
  %v311 = vadd.f32 0.0, %v310
  %v312 = vpop.f32.mrb[0].mxu0
  %313 = vdwg.mxu0
  %v314 = vadd.f32 %v240, %v311
  %v315 = vtanh.pop %v314
  %s316 = scalar_lea.vmem [#allocation3], 4
  %317 = vst.msk [vmem:[%s316] sm:$0x3] %vm144, %v315
  %s318 = scalar_lea.vmem %s0, 6
  %v319 = vld [vmem:[%s318] sm:$0x3]
  %321 = vset.pattern.permute.xlu0 0
  %322 = vperm.xlu0 %321, %v319
  %v323 = vpop.permute.xlu0 %322
  %v325 = vmul.f32 %v323, %v54
  %v326 = vadd.f32 %v325, %v61
  %v328 = vsel %vm64, %v315, 0
  %330 = vmatprep.subr.mxu0 0.0
  %331 = vmatpush1.msra.mxu0 %v39
  %332 = vmatprep.subr.mxu0 0.0
  %333 = vmatpush1.msra.mxu0 %v40
  %334 = vmatprep.subr.mxu0 0.0
  %335 = vmatpush1.msra.mxu0 %v41
  %336 = vmatprep.subr.mxu0 0.0
  %337 = vmatpush1.msra.mxu0 %v70
  %338 = vmatprep.subr.mxu0 0.0
  %339 = vmatpush1.msra.mxu0 0.0
  %340 = vmatprep.subr.mxu0 0.0
  %341 = vmatpush1.msra.mxu0 0.0
  %342 = vmatprep.subr.mxu0 0.0
  %343 = vmatpush1.msra.mxu0 0.0
  %344 = vmatprep.subr.mxu0 0.0
  %345 = vmatpush1.msra.mxu0 0.0
  %346 = vmatprep.subr.mxu0 0.0
  %347 = vmatpush1.msra.mxu0 0.0
  %348 = vmatprep.subr.mxu0 0.0
  %349 = vmatpush1.msra.mxu0 0.0
  %350 = vmatprep.subr.mxu0 0.0
  %351 = vmatpush1.msra.mxu0 0.0
  %352 = vmatprep.subr.mxu0 0.0
  %353 = vmatpush1.msra.mxu0 0.0
  %354 = vmatprep.subr.mxu0 0.0
  %355 = vmatpush1.msra.mxu0 0.0
  %356 = vmatprep.subr.mxu0 0.0
  %357 = vmatpush1.msra.mxu0 0.0
  %358 = vmatprep.subr.mxu0 0.0
  %359 = vmatpush1.msra.mxu0 0.0
  %360 = vmatprep.subr.mxu0 0.0
  %361 = vmatpush1.msra.mxu0 0.0
  %362 = vmatprep.subr.mxu0 0.0
  %363 = vmatpush1.msra.mxu0 0.0
  %364 = vmatprep.subr.mxu0 0.0
  %365 = vmatpush1.msra.mxu0 0.0
  %366 = vmatprep.subr.mxu0 0.0
  %367 = vmatpush1.msra.mxu0 0.0
  %368 = vmatprep.subr.mxu0 0.0
  %369 = vmatpush1.msra.mxu0 0.0
  %370 = vmatprep.subr.mxu0 0.0
  %371 = vmatpush1.msra.mxu0 0.0
  %372 = vmatprep.subr.mxu0 0.0
  %373 = vmatpush1.msra.mxu0 0.0
  %374 = vmatprep.subr.mxu0 0.0
  %375 = vmatpush1.msra.mxu0 0.0
  %376 = vmatprep.subr.mxu0 0.0
  %377 = vmatpush1.msra.mxu0 0.0
  %378 = vmatprep.subr.mxu0 0.0
  %379 = vmatpush1.msra.mxu0 0.0
  %380 = vmatprep.subr.mxu0 0.0
  %381 = vmatpush1.msra.mxu0 0.0
  %382 = vmatprep.subr.mxu0 0.0
  %383 = vmatpush1.msra.mxu0 0.0
  %384 = vmatprep.subr.mxu0 0.0
  %385 = vmatpush1.msra.mxu0 0.0
  %386 = vmatprep.subr.mxu0 0.0
  %387 = vmatpush1.msra.mxu0 0.0
  %388 = vmatprep.subr.mxu0 0.0
  %389 = vmatpush1.msra.mxu0 0.0
  %390 = vmatprep.subr.mxu0 0.0
  %391 = vmatpush1.msra.mxu0 0.0
  %392 = vmatprep.subr.mxu0 0.0
  %393 = vmatpush1.msra.mxu0 0.0
  %394 = vmatprep.mubr.f32.mxu0 0.0
  %395 = vmatmul.mubr.f32.gmra.mrb[0].mxu0 %v328
  %v396 = vpop.f32.mrb[0].mxu0
  %v397 = vadd.f32 0.0, %v396
  %v398 = vpop.f32.mrb[0].mxu0
  %399 = vdwg.mxu0
  %v400 = vadd.f32 %v326, %v397
  %v401 = vtanh.pop %v400
  %s402 = scalar_lea.vmem [#allocation3], 6
  %403 = vst.msk [vmem:[%s402] sm:$0x3] %vm144, %v401
  %s404 = scalar_lea.vmem %s0, 8
  %v405 = vld [vmem:[%s404] sm:$0x3]
  %407 = vset.pattern.permute.xlu0 0
  %408 = vperm.xlu0 %407, %v405
  %v409 = vpop.permute.xlu0 %408
  %v411 = vmul.f32 %v409, %v54
  %v412 = vadd.f32 %v411, %v61
  %v414 = vsel %vm64, %v401, 0
  %416 = vmatprep.subr.mxu0 0.0
  %417 = vmatpush1.msra.mxu0 %v39
  %418 = vmatprep.subr.mxu0 0.0
  %419 = vmatpush1.msra.mxu0 %v40
  %420 = vmatprep.subr.mxu0 0.0
  %421 = vmatpush1.msra.mxu0 %v41
  %422 = vmatprep.subr.mxu0 0.0
  %423 = vmatpush1.msra.mxu0 %v70
  %424 = vmatprep.subr.mxu0 0.0
  %425 = vmatpush1.msra.mxu0 0.0
  %426 = vmatprep.subr.mxu0 0.0
  %427 = vmatpush1.msra.mxu0 0.0
  %428 = vmatprep.subr.mxu0 0.0
  %429 = vmatpush1.msra.mxu0 0.0
  %430 = vmatprep.subr.mxu0 0.0
  %431 = vmatpush1.msra.mxu0 0.0
  %432 = vmatprep.subr.mxu0 0.0
  %433 = vmatpush1.msra.mxu0 0.0
  %434 = vmatprep.subr.mxu0 0.0
  %435 = vmatpush1.msra.mxu0 0.0
  %436 = vmatprep.subr.mxu0 0.0
  %437 = vmatpush1.msra.mxu0 0.0
  %438 = vmatprep.subr.mxu0 0.0
  %439 = vmatpush1.msra.mxu0 0.0
  %440 = vmatprep.subr.mxu0 0.0
  %441 = vmatpush1.msra.mxu0 0.0
  %442 = vmatprep.subr.mxu0 0.0
  %443 = vmatpush1.msra.mxu0 0.0
  %444 = vmatprep.subr.mxu0 0.0
  %445 = vmatpush1.msra.mxu0 0.0
  %446 = vmatprep.subr.mxu0 0.0
  %447 = vmatpush1.msra.mxu0 0.0
  %448 = vmatprep.subr.mxu0 0.0
  %449 = vmatpush1.msra.mxu0 0.0
  %450 = vmatprep.subr.mxu0 0.0
  %451 = vmatpush1.msra.mxu0 0.0
  %452 = vmatprep.subr.mxu0 0.0
  %453 = vmatpush1.msra.mxu0 0.0
  %454 = vmatprep.subr.mxu0 0.0
  %455 = vmatpush1.msra.mxu0 0.0
  %456 = vmatprep.subr.mxu0 0.0
  %457 = vmatpush1.msra.mxu0 0.0
  %458 = vmatprep.subr.mxu0 0.0
  %459 = vmatpush1.msra.mxu0 0.0
  %460 = vmatprep.subr.mxu0 0.0
  %461 = vmatpush1.msra.mxu0 0.0
  %462 = vmatprep.subr.mxu0 0.0
  %463 = vmatpush1.msra.mxu0 0.0
  %464 = vmatprep.subr.mxu0 0.0
  %465 = vmatpush1.msra.mxu0 0.0
  %466 = vmatprep.subr.mxu0 0.0
  %467 = vmatpush1.msra.mxu0 0.0
  %468 = vmatprep.subr.mxu0 0.0
  %469 = vmatpush1.msra.mxu0 0.0
  %470 = vmatprep.subr.mxu0 0.0
  %471 = vmatpush1.msra.mxu0 0.0
  %472 = vmatprep.subr.mxu0 0.0
  %473 = vmatpush1.msra.mxu0 0.0
  %474 = vmatprep.subr.mxu0 0.0
  %475 = vmatpush1.msra.mxu0 0.0
  %476 = vmatprep.subr.mxu0 0.0
  %477 = vmatpush1.msra.mxu0 0.0
  %478 = vmatprep.subr.mxu0 0.0
  %479 = vmatpush1.msra.mxu0 0.0
  %480 = vmatprep.mubr.f32.mxu0 0.0
  %481 = vmatmul.mubr.f32.gmra.mrb[0].mxu0 %v414
  %v482 = vpop.f32.mrb[0].mxu0
  %v483 = vadd.f32 0.0, %v482
  %v484 = vpop.f32.mrb[0].mxu0
  %485 = vdwg.mxu0
  %v486 = vadd.f32 %v412, %v483
  %v487 = vtanh.pop %v486
  %s488 = scalar_lea.vmem [#allocation3], 8
  %489 = vst.msk [vmem:[%s488] sm:$0x3] %vm144, %v487
  %s490 = scalar_lea.vmem %s0, 10
  %v491 = vld [vmem:[%s490] sm:$0x3]
  %493 = vset.pattern.permute.xlu0 0
  %494 = vperm.xlu0 %493, %v491
  %v495 = vpop.permute.xlu0 %494
  %v497 = vmul.f32 %v495, %v54
  %v498 = vadd.f32 %v497, %v61
  %v500 = vsel %vm64, %v487, 0
  %502 = vmatprep.subr.mxu0 0.0
  %503 = vmatpush1.msra.mxu0 %v39
  %504 = vmatprep.subr.mxu0 0.0
  %505 = vmatpush1.msra.mxu0 %v40
  %506 = vmatprep.subr.mxu0 0.0
  %507 = vmatpush1.msra.mxu0 %v41
  %508 = vmatprep.subr.mxu0 0.0
  %509 = vmatpush1.msra.mxu0 %v70
  %510 = vmatprep.subr.mxu0 0.0
  %511 = vmatpush1.msra.mxu0 0.0
  %512 = vmatprep.subr.mxu0 0.0
  %513 = vmatpush1.msra.mxu0 0.0
  %514 = vmatprep.subr.mxu0 0.0
  %515 = vmatpush1.msra.mxu0 0.0
  %516 = vmatprep.subr.mxu0 0.0
  %517 = vmatpush1.msra.mxu0 0.0
  %518 = vmatprep.subr.mxu0 0.0
  %519 = vmatpush1.msra.mxu0 0.0
  %520 = vmatprep.subr.mxu0 0.0
  %521 = vmatpush1.msra.mxu0 0.0
  %522 = vmatprep.subr.mxu0 0.0
  %523 = vmatpush1.msra.mxu0 0.0
  %524 = vmatprep.subr.mxu0 0.0
  %525 = vmatpush1.msra.mxu0 0.0
  %526 = vmatprep.subr.mxu0 0.0
  %527 = vmatpush1.msra.mxu0 0.0
  %528 = vmatprep.subr.mxu0 0.0
  %529 = vmatpush1.msra.mxu0 0.0
  %530 = vmatprep.subr.mxu0 0.0
  %531 = vmatpush1.msra.mxu0 0.0
  %532 = vmatprep.subr.mxu0 0.0
  %533 = vmatpush1.msra.mxu0 0.0
  %534 = vmatprep.subr.mxu0 0.0
  %535 = vmatpush1.msra.mxu0 0.0
  %536 = vmatprep.subr.mxu0 0.0
  %537 = vmatpush1.msra.mxu0 0.0
  %538 = vmatprep.subr.mxu0 0.0
  %539 = vmatpush1.msra.mxu0 0.0
  %540 = vmatprep.subr.mxu0 0.0
  %541 = vmatpush1.msra.mxu0 0.0
  %542 = vmatprep.subr.mxu0 0.0
  %543 = vmatpush1.msra.mxu0 0.0
  %544 = vmatprep.subr.mxu0 0.0
  %545 = vmatpush1.msra.mxu0 0.0
  %546 = vmatprep.subr.mxu0 0.0
  %547 = vmatpush1.msra.mxu0 0.0
  %548 = vmatprep.subr.mxu0 0.0
  %549 = vmatpush1.msra.mxu0 0.0
  %550 = vmatprep.subr.mxu0 0.0
  %551 = vmatpush1.msra.mxu0 0.0
  %552 = vmatprep.subr.mxu0 0.0
  %553 = vmatpush1.msra.mxu0 0.0
  %554 = vmatprep.subr.mxu0 0.0
  %555 = vmatpush1.msra.mxu0 0.0
  %556 = vmatprep.subr.mxu0 0.0
  %557 = vmatpush1.msra.mxu0 0.0
  %558 = vmatprep.subr.mxu0 0.0
  %559 = vmatpush1.msra.mxu0 0.0
  %560 = vmatprep.subr.mxu0 0.0
  %561 = vmatpush1.msra.mxu0 0.0
  %562 = vmatprep.subr.mxu0 0.0
  %563 = vmatpush1.msra.mxu0 0.0
  %564 = vmatprep.subr.mxu0 0.0
  %565 = vmatpush1.msra.mxu0 0.0
  %566 = vmatprep.mubr.f32.mxu0 0.0
  %567 = vmatmul.mubr.f32.gmra.mrb[0].mxu0 %v500
  %v568 = vpop.f32.mrb[0].mxu0
  %v569 = vadd.f32 0.0, %v568
  %v570 = vpop.f32.mrb[0].mxu0
  %571 = vdwg.mxu0
  %v572 = vadd.f32 %v498, %v569
  %v573 = vtanh.pop %v572
  %s574 = scalar_lea.vmem [#allocation3], 10
  %575 = vst.msk [vmem:[%s574] sm:$0x3] %vm144, %v573
  %s576 = scalar_lea.vmem %s0, 12
  %v577 = vld [vmem:[%s576] sm:$0x3]
  %579 = vset.pattern.permute.xlu0 0
  %580 = vperm.xlu0 %579, %v577
  %v581 = vpop.permute.xlu0 %580
  %v583 = vmul.f32 %v581, %v54
  %v584 = vadd.f32 %v583, %v61
  %v586 = vsel %vm64, %v573, 0
  %588 = vmatprep.subr.mxu0 0.0
  %589 = vmatpush1.msra.mxu0 %v39
  %590 = vmatprep.subr.mxu0 0.0
  %591 = vmatpush1.msra.mxu0 %v40
  %592 = vmatprep.subr.mxu0 0.0
  %593 = vmatpush1.msra.mxu0 %v41
  %594 = vmatprep.subr.mxu0 0.0
  %595 = vmatpush1.msra.mxu0 %v70
  %596 = vmatprep.subr.mxu0 0.0
  %597 = vmatpush1.msra.mxu0 0.0
  %598 = vmatprep.subr.mxu0 0.0
  %599 = vmatpush1.msra.mxu0 0.0
  %600 = vmatprep.subr.mxu0 0.0
  %601 = vmatpush1.msra.mxu0 0.0
  %602 = vmatprep.subr.mxu0 0.0
  %603 = vmatpush1.msra.mxu0 0.0
  %604 = vmatprep.subr.mxu0 0.0
  %605 = vmatpush1.msra.mxu0 0.0
  %606 = vmatprep.subr.mxu0 0.0
  %607 = vmatpush1.msra.mxu0 0.0
  %608 = vmatprep.subr.mxu0 0.0
  %609 = vmatpush1.msra.mxu0 0.0
  %610 = vmatprep.subr.mxu0 0.0
  %611 = vmatpush1.msra.mxu0 0.0
  %612 = vmatprep.subr.mxu0 0.0
  %613 = vmatpush1.msra.mxu0 0.0
  %614 = vmatprep.subr.mxu0 0.0
  %615 = vmatpush1.msra.mxu0 0.0
  %616 = vmatprep.subr.mxu0 0.0
  %617 = vmatpush1.msra.mxu0 0.0
  %618 = vmatprep.subr.mxu0 0.0
  %619 = vmatpush1.msra.mxu0 0.0
  %620 = vmatprep.subr.mxu0 0.0
  %621 = vmatpush1.msra.mxu0 0.0
  %622 = vmatprep.subr.mxu0 0.0
  %623 = vmatpush1.msra.mxu0 0.0
  %624 = vmatprep.subr.mxu0 0.0
  %625 = vmatpush1.msra.mxu0 0.0
  %626 = vmatprep.subr.mxu0 0.0
  %627 = vmatpush1.msra.mxu0 0.0
  %628 = vmatprep.subr.mxu0 0.0
  %629 = vmatpush1.msra.mxu0 0.0
  %630 = vmatprep.subr.mxu0 0.0
  %631 = vmatpush1.msra.mxu0 0.0
  %632 = vmatprep.subr.mxu0 0.0
  %633 = vmatpush1.msra.mxu0 0.0
  %634 = vmatprep.subr.mxu0 0.0
  %635 = vmatpush1.msra.mxu0 0.0
  %636 = vmatprep.subr.mxu0 0.0
  %637 = vmatpush1.msra.mxu0 0.0
  %638 = vmatprep.subr.mxu0 0.0
  %639 = vmatpush1.msra.mxu0 0.0
  %640 = vmatprep.subr.mxu0 0.0
  %641 = vmatpush1.msra.mxu0 0.0
  %642 = vmatprep.subr.mxu0 0.0
  %643 = vmatpush1.msra.mxu0 0.0
  %644 = vmatprep.subr.mxu0 0.0
  %645 = vmatpush1.msra.mxu0 0.0
  %646 = vmatprep.subr.mxu0 0.0
  %647 = vmatpush1.msra.mxu0 0.0
  %648 = vmatprep.subr.mxu0 0.0
  %649 = vmatpush1.msra.mxu0 0.0
  %650 = vmatprep.subr.mxu0 0.0
  %651 = vmatpush1.msra.mxu0 0.0
  %652 = vmatprep.mubr.f32.mxu0 0.0
  %653 = vmatmul.mubr.f32.gmra.mrb[0].mxu0 %v586
  %v654 = vpop.f32.mrb[0].mxu0
  %v655 = vadd.f32 0.0, %v654
  %v656 = vpop.f32.mrb[0].mxu0
  %657 = vdwg.mxu0
  %v658 = vadd.f32 %v584, %v655
  %v659 = vtanh.pop %v658
  %s660 = scalar_lea.vmem [#allocation3], 12
  %661 = vst.msk [vmem:[%s660] sm:$0x3] %vm144, %v659
  %s662 = scalar_lea.vmem %s0, 14
  %v663 = vld [vmem:[%s662] sm:$0x3]
  %665 = vset.pattern.permute.xlu0 0
  %666 = vperm.xlu0 %665, %v663
  %v667 = vpop.permute.xlu0 %666
  %v669 = vmul.f32 %v667, %v54
  %v670 = vadd.f32 %v669, %v61
  %v672 = vsel %vm64, %v659, 0
  %674 = vmatprep.subr.mxu0 0.0
  %675 = vmatpush1.msra.mxu0 %v39
  %676 = vmatprep.subr.mxu0 0.0
  %677 = vmatpush1.msra.mxu0 %v40
  %678 = vmatprep.subr.mxu0 0.0
  %679 = vmatpush1.msra.mxu0 %v41
  %680 = vmatprep.subr.mxu0 0.0
  %681 = vmatpush1.msra.mxu0 %v70
  %682 = vmatprep.subr.mxu0 0.0
  %683 = vmatpush1.msra.mxu0 0.0
  %684 = vmatprep.subr.mxu0 0.0
  %685 = vmatpush1.msra.mxu0 0.0
  %686 = vmatprep.subr.mxu0 0.0
  %687 = vmatpush1.msra.mxu0 0.0
  %688 = vmatprep.subr.mxu0 0.0
  %689 = vmatpush1.msra.mxu0 0.0
  %690 = vmatprep.subr.mxu0 0.0
  %691 = vmatpush1.msra.mxu0 0.0
  %692 = vmatprep.subr.mxu0 0.0
  %693 = vmatpush1.msra.mxu0 0.0
  %694 = vmatprep.subr.mxu0 0.0
  %695 = vmatpush1.msra.mxu0 0.0
  %696 = vmatprep.subr.mxu0 0.0
  %697 = vmatpush1.msra.mxu0 0.0
  %698 = vmatprep.subr.mxu0 0.0
  %699 = vmatpush1.msra.mxu0 0.0
  %700 = vmatprep.subr.mxu0 0.0
  %701 = vmatpush1.msra.mxu0 0.0
  %702 = vmatprep.subr.mxu0 0.0
  %703 = vmatpush1.msra.mxu0 0.0
  %704 = vmatprep.subr.mxu0 0.0
  %705 = vmatpush1.msra.mxu0 0.0
  %706 = vmatprep.subr.mxu0 0.0
  %707 = vmatpush1.msra.mxu0 0.0
  %708 = vmatprep.subr.mxu0 0.0
  %709 = vmatpush1.msra.mxu0 0.0
  %710 = vmatprep.subr.mxu0 0.0
  %711 = vmatpush1.msra.mxu0 0.0
  %712 = vmatprep.subr.mxu0 0.0
  %713 = vmatpush1.msra.mxu0 0.0
  %714 = vmatprep.subr.mxu0 0.0
  %715 = vmatpush1.msra.mxu0 0.0
  %716 = vmatprep.subr.mxu0 0.0
  %717 = vmatpush1.msra.mxu0 0.0
  %718 = vmatprep.subr.mxu0 0.0
  %719 = vmatpush1.msra.mxu0 0.0
  %720 = vmatprep.subr.mxu0 0.0
  %721 = vmatpush1.msra.mxu0 0.0
  %722 = vmatprep.subr.mxu0 0.0
  %723 = vmatpush1.msra.mxu0 0.0
  %724 = vmatprep.subr.mxu0 0.0
  %725 = vmatpush1.msra.mxu0 0.0
  %726 = vmatprep.subr.mxu0 0.0
  %727 = vmatpush1.msra.mxu0 0.0
  %728 = vmatprep.subr.mxu0 0.0
  %729 = vmatpush1.msra.mxu0 0.0
  %730 = vmatprep.subr.mxu0 0.0
  %731 = vmatpush1.msra.mxu0 0.0
  %732 = vmatprep.subr.mxu0 0.0
  %733 = vmatpush1.msra.mxu0 0.0
  %734 = vmatprep.subr.mxu0 0.0
  %735 = vmatpush1.msra.mxu0 0.0
  %736 = vmatprep.subr.mxu0 0.0
  %737 = vmatpush1.msra.mxu0 0.0
  %738 = vmatprep.mubr.f32.mxu0 0.0
  %739 = vmatmul.mubr.f32.gmra.mrb[0].mxu0 %v672
  %v740 = vpop.f32.mrb[0].mxu0
  %v741 = vadd.f32 0.0, %v740
  %v742 = vpop.f32.mrb[0].mxu0
  %743 = vdwg.mxu0
  %v744 = vadd.f32 %v670, %v741
  %v745 = vtanh.pop %v744
  %s746 = scalar_lea.vmem [#allocation3], 14
  %747 = vst.msk [vmem:[%s746] sm:$0x3] %vm144, %v745
  %748 = vst.msk [vmem:[#allocation2] sm:$0x3] %vm144, %v745
  %749 = vst.msk [vmem:[%s8] sm:$0x3] %vm144, %v745
  %v750 = vld [vmem:[#allocation3] sm:$0x3]
  %v751 = vld [vmem:[#allocation3 + $0x2] sm:$0x3]
  %v752 = vld [vmem:[#allocation3 + $0x4] sm:$0x3]
  %v753 = vld [vmem:[#allocation3 + $0x6] sm:$0x3]
  %v754 = vld [vmem:[#allocation3 + $0x8] sm:$0x3]
  %v755 = vld [vmem:[#allocation3 + $0xa] sm:$0x3]
  %v756 = vld [vmem:[#allocation3 + $0xc] sm:$0x3]
  %v757 = vld [vmem:[#allocation3 + $0xe] sm:$0x3]
  %v758 = vld [vmem:[%s4] sm:$0x1]
  %v760 = vlaneseq
  %v761 = vshrl.u32 %v760, 7
  %v762 = vsub.s32 0, %v761
  %v763 = vrot.slane %v758, %v762
  %v765 = vmul.f32 %v750, %v763
  %v766 = vmul.f32 %v751, %v763
  %v767 = vmul.f32 %v752, %v763
  %v768 = vmul.f32 %v753, %v763
  %v769 = vmul.f32 %v754, %v763
  %v770 = vmul.f32 %v755, %v763
  %v771 = vmul.f32 %v756, %v763
  %v772 = vmul.f32 %v757, %v763
  %v773 = vsel %vm144, %v765, 0.0
  %774 = vadd.xlane.f32.xlu0 %v773
  %v775 = vpop.xlane.xlu0 %774
  %v776 = vsel %vm144, %v766, 0.0
  %777 = vadd.xlane.f32.xlu0 %v776
  %v778 = vpop.xlane.xlu0 %777
  %v779 = vsel %vm144, %v767, 0.0
  %780 = vadd.xlane.f32.xlu0 %v779
  %v781 = vpop.xlane.xlu0 %780
  %v782 = vsel %vm144, %v768, 0.0
  %783 = vadd.xlane.f32.xlu0 %v782
  %v784 = vpop.xlane.xlu0 %783
  %v785 = vsel %vm144, %v769, 0.0
  %786 = vadd.xlane.f32.xlu0 %v785
  %v787 = vpop.xlane.xlu0 %786
  %v788 = vsel %vm144, %v770, 0.0
  %789 = vadd.xlane.f32.xlu0 %v788
  %v790 = vpop.xlane.xlu0 %789
  %v791 = vsel %vm144, %v771, 0.0
  %792 = vadd.xlane.f32.xlu0 %v791
  %v793 = vpop.xlane.xlu0 %792
  %v794 = vsel %vm144, %v772, 0.0
  %795 = vadd.xlane.f32.xlu0 %v794
  %v796 = vpop.xlane.xlu0 %795
  %v797 = vld [vmem:[#allocation4] sm:$0x1]
  %v799 = vlaneseq
  %v800 = vshrl.u32 %v799, 7
  %v801 = vsub.s32 0, %v800
  %v802 = vrot.slane %v797, %v801
  %803 = vset.pattern.permute.xlu0 0
  %804 = vperm.xlu0 %803, %v802
  %v805 = vpop.permute.xlu0 %804
  %v807 = vadd.f32 %v775, %v805
  %v808 = vadd.f32 %v778, %v805
  %v809 = vadd.f32 %v781, %v805
  %v810 = vadd.f32 %v784, %v805
  %v811 = vadd.f32 %v787, %v805
  %v812 = vadd.f32 %v790, %v805
  %v813 = vadd.f32 %v793, %v805
  %v814 = vadd.f32 %v796, %v805
  %v815 = vtanh.pop %v807
  %v816 = vtanh.pop %v808
  %v817 = vtanh.pop %v809
  %v818 = vtanh.pop %v810
  %v819 = vtanh.pop %v811
  %v820 = vtanh.pop %v812
  %v821 = vtanh.pop %v813
  %v822 = vtanh.pop %v814
  %v831 = vlaneseq
  %v832 = vand.u32 %v831, 127
  %v833 = vlaneseq
  %v834 = vshrl.u32 %v833, 7
  %v835 = vsub.s32 %v832, %v834
  %v836 = vrot.slane %v815, %v835
  %v837 = vlaneseq
  %v838 = vshrl.u32 %v837, 7
  %v839 = vsub.s32 %v832, %v838
  %v840 = vrot.slane %v816, %v839
  %v841 = vlaneseq
  %v842 = vshrl.u32 %v841, 7
  %v843 = vsub.s32 %v832, %v842
  %v844 = vrot.slane %v817, %v843
  %v845 = vlaneseq
  %v846 = vshrl.u32 %v845, 7
  %v847 = vsub.s32 %v832, %v846
  %v848 = vrot.slane %v818, %v847
  %v849 = vlaneseq
  %v850 = vshrl.u32 %v849, 7
  %v851 = vsub.s32 %v832, %v850
  %v852 = vrot.slane %v819, %v851
  %v853 = vlaneseq
  %v854 = vshrl.u32 %v853, 7
  %v855 = vsub.s32 %v832, %v854
  %v856 = vrot.slane %v820, %v855
  %v857 = vlaneseq
  %v858 = vshrl.u32 %v857, 7
  %v859 = vsub.s32 %v832, %v858
  %v860 = vrot.slane %v821, %v859
  %v861 = vlaneseq
  %v862 = vshrl.u32 %v861, 7
  %v863 = vsub.s32 %v832, %v862
  %v864 = vrot.slane %v822, %v863
  %vm865 = vcmask 1041409
  %v866 = vsel %vm865, %v840, %v836
  %vm867 = vcmask 1042434
  %v868 = vsel %vm867, %v844, %v866
  %vm869 = vcmask 1043459
  %v870 = vsel %vm869, %v848, %v868
  %vm871 = vcmask 1044484
  %v872 = vsel %vm871, %v852, %v870
  %vm873 = vcmask 1045509
  %v874 = vsel %vm873, %v856, %v872
  %vm875 = vcmask 1046534
  %v876 = vsel %vm875, %v860, %v874
  %vm877 = vcmask 1047559
  %v878 = vsel %vm877, %v864, %v876
  %vm880 = vcmask 15360
  %881 = vst.msk [vmem:[%s7] sm:$0xff] %vm880, %v878
  // Predicated region
  $region34: #{tpu_custom_call.1} parent=0 // pred_check
    _
  $region35: #{tpu_custom_call.1} parent=0 // pred_check_branch
    %883 = sbr.rel (0) target = $region37
  $region36: #{tpu_custom_call.1} parent=0 // pred_region
    _
  $region37: #{tpu_custom_call.1} parent=0 // pred_fallthru
    _
  // Predicated region
  $region38: #{tpu_custom_call.1} parent=0 // pred_check
    _
  $region39: #{tpu_custom_call.1} parent=0 // pred_check_branch
    %885 = sbr.rel (0) target = $region41
  $region40: #{tpu_custom_call.1} parent=0 // pred_region
    _
  $region41: #{tpu_custom_call.1} parent=0 // pred_fallthru
    _
  // Predicated region
  $region42: #{tpu_custom_call.1} parent=0 // pred_check
    _
  $region43: #{tpu_custom_call.1} parent=0 // pred_check_branch
    %887 = sbr.rel (0) target = $region45
  $region44: #{tpu_custom_call.1} parent=0 // pred_region
    _
  $region45: #{tpu_custom_call.1} parent=0 // pred_fallthru
    _
  // Predicated region
  $region46: #{tpu_custom_call.1} parent=0 // pred_check
    _
  $region47: #{tpu_custom_call.1} parent=0 // pred_check_branch
    %889 = sbr.rel (0) target = $region49
  $region48: #{tpu_custom_call.1} parent=0 // pred_region
    _
  $region49: #{tpu_custom_call.1} parent=0 // pred_fallthru
    _

</llo_original>
